<compile_context>
chip_gen: v7x
topology: tpu7x:2x2x1
jax: 0.10.0
libtpu: 0.0.40
codegen_flags: <defaults>
</compile_context>

<pallas_src>
import math
from functools import partial

import jax
import jax.numpy as jnp
from jax.experimental import pallas as pl
from jax.experimental.pallas import tpu as pltpu


def _llama_hidden_dim(dim, hidden_dim, multiple_of, ffn_dim_multiplier=None):
    hidden_dim = int(2 * hidden_dim / 3)
    if ffn_dim_multiplier is not None:
        hidden_dim = int(ffn_dim_multiplier * hidden_dim)
    hidden_dim = multiple_of * ((hidden_dim + multiple_of - 1) // multiple_of)
    return hidden_dim


def _round_up(x, m):
    return (x + m - 1) // m * m


# ---------------------------------------------------------------------------
# Kernel
# ---------------------------------------------------------------------------
def _ffn_kernel(x_ref, w1_ref, w3_ref, w2_ref, o_ref, acc_ref, gated_ref, *, chunk):
    # x_ref:     (tm, dim)            token tile (revisited across the k axis)
    # w1_ref:    (dim, tn)            gate-proj tile for hidden slice k
    # w3_ref:    (dim, tn)            up-proj tile for hidden slice k
    # w2_ref:    (tn, dim)            down-proj tile for hidden slice k
    # o_ref:     (tm, dim)            output tile (same block for all k)
    # acc_ref:   (tm, dim)  f32 VMEM  accumulator across the hidden reduction
    # gated_ref: (tm, tn)   VMEM      silu(x@w1) * (x@w3), MXU-input dtype
    k = pl.program_id(1)

    @pl.when(k == 0)
    def _():
        acc_ref[...] = jnp.zeros_like(acc_ref)

    x = x_ref[...]
    tn = gated_ref.shape[1]

    # Sub-tile the gate/up epilogue over `chunk` columns so the f32 intermediates
    # (h1, h3) stay small; gated activations are staged once in VMEM in the MXU
    # input dtype and consumed by a single W2 matmul (one accumulator update) per
    # grid step.  `chunk` is static, so the slices below are zero-cost ref views.
    for c in range(tn // chunk):
        lo, hi = c * chunk, (c + 1) * chunk
        h1 = jnp.dot(x, w1_ref[:, lo:hi], preferred_element_type=jnp.float32)
        h3 = jnp.dot(x, w3_ref[:, lo:hi], preferred_element_type=jnp.float32)
        # SiLU gating in f32 (sigmoid goes to the EUP), one cast for the W2 input.
        gated_ref[:, lo:hi] = ((h1 * jax.nn.sigmoid(h1)) * h3).astype(gated_ref.dtype)

    acc_ref[...] += jnp.dot(gated_ref[...], w2_ref[...],
                            preferred_element_type=jnp.float32)

    @pl.when(k == pl.num_programs(1) - 1)
    def _():
        o_ref[...] = acc_ref[...].astype(o_ref.dtype)


# ---------------------------------------------------------------------------
# Tiling heuristics (generation / VMEM aware)
# ---------------------------------------------------------------------------
def _tpu_vmem_bytes():
    try:
        return int(pltpu.get_tpu_info().vmem_capacity_bytes)
    except Exception:
        return 64 << 20  # conservative fallback (fits every generation)


def _tm_target():
    try:
        kind = jax.devices()[0].device_kind.lower()
    except Exception:
        kind = ""
    if "v5" in kind:
        return 256    # v5e: ~240 FLOPs/byte roofline -> already MXU-bound at 256
    if "v6" in kind:
        return 1024   # v6e: ~650 FLOPs/byte -> needs ~768-1024 tokens per tile
    return 512        # v7x (and unknown): ~310 FLOPs/byte, capped by 64 MiB VMEM


def _footprint(tm, tn, dim, act_b, w_b, wbufs):
    # Exact per-kernel VMEM footprint (bytes): double-buffered x/out, `wbufs`-deep
    # weight tiles, f32 accumulator, gated-activation scratch.
    return (2 * tm * dim * act_b                       # x
            + 2 * tm * dim * act_b                     # out
            + wbufs * (2 * dim * tn + tn * dim) * w_b  # w1, w3, w2 tiles
            + tm * dim * 4                             # f32 accumulator
            + tm * tn * w_b)                           # gated scratch


def _choose_tn(hidden, tm, dim, act_b, w_b, wbufs, budget, tn_cap=512):
    max_tn = min(tn_cap, _round_up(hidden, 128))
    best_any, best_div = None, None
    tn = 128
    while tn <= max_tn:
        if _footprint(tm, tn, dim, act_b, w_b, wbufs) <= budget:
            best_any = tn
            if hidden % tn == 0:
                best_div = tn
        tn += 128
    if best_any is None:
        return 128
    # Prefer a divisor of `hidden` (no weight padding) unless it is much smaller
    # than what the VMEM budget allows.
    if best_div is not None and best_div * 2 > best_any:
        return best_div
    return best_any


def _choose_chunk(tn, cap=256):
    if tn <= cap:
        return tn
    best, c = 128, 128
    while c <= cap:
        if tn % c == 0:
            best = c
        c += 128
    return best


# ---------------------------------------------------------------------------
# Wrapper
# ---------------------------------------------------------------------------
def feed_forward(x, w1, w3, w2, *, tm=None, tn=None, interpret=False):
    """SwiGLU FFN: (silu(x @ w1) * (x @ w3)) @ w2.

    x: [T, dim]; w1, w3: [dim, hidden]; w2: [hidden, dim] -> [T, dim].
    Weights are stored pre-transposed ([in, out]) vs torch nn.Linear.weight.
    """
    T, dim = x.shape
    hidden = w1.shape[1]
    assert w3.shape == (dim, hidden) and w2.shape == (hidden, dim)
    assert dim % 128 == 0, "feature dim must be lane-aligned (multiple of 128)"

    act_b = jnp.dtype(x.dtype).itemsize
    w_b = jnp.dtype(w2.dtype).itemsize

    vmem_cap = _tpu_vmem_bytes()
    deep_weight_pipe = vmem_cap >= (100 << 20)     # v5e/v6e only; skip on v7x
    wbufs = 3 if deep_weight_pipe else 2
    budget = int(0.85 * vmem_cap) - (4 << 20)      # Mosaic internal-scratch headroom

    # --- token tile --------------------------------------------------------
    if tm is None:
        tm = min(_tm_target(), _round_up(T, 16))
        while tm > 64 and _footprint(tm, 128, dim, act_b, w_b, wbufs) > budget:
            tm = _round_up(tm // 2, 16)
    Tp = _round_up(T, tm)
    xp = x if Tp == T else jnp.pad(x, ((0, Tp - T), (0, 0)))

    # --- hidden tile -------------------------------------------------------
    if tn is None:
        tn = _choose_tn(hidden, tm, dim, act_b, w_b, wbufs, budget)
    assert tn % 128 == 0

    hidden_p = _round_up(hidden, tn)
    if hidden_p != hidden:
        # Zero-padded hidden columns contribute silu(0)*0 = 0 through zero rows of
        # w2, so results are exact.
        # TODO(synk): hoist this padding to weight-load time; done per-call it
        # re-reads/writes the full weights in HBM once per forward.
        w1 = jnp.pad(w1, ((0, 0), (0, hidden_p - hidden)))
        w3 = jnp.pad(w3, ((0, 0), (0, hidden_p - hidden)))
        w2 = jnp.pad(w2, ((0, hidden_p - hidden), (0, 0)))
    kt = hidden_p // tn
    chunk = _choose_chunk(tn)

    vmem_limit = int(min(0.95 * vmem_cap,
                         max(0.9 * vmem_cap,
                             _footprint(tm, tn, dim, act_b, w_b, wbufs) + (6 << 20))))
    vmem_limit = max(vmem_limit, 32 << 20)

    def _weight_spec(shape, index_map):
        if deep_weight_pipe:
            try:
                return pl.BlockSpec(shape, index_map, pipeline_mode=pl.Buffered(3))
            except TypeError:
                pass
        return pl.BlockSpec(shape, index_map)

    grid_spec = pltpu.PrefetchScalarGridSpec(
        num_scalar_prefetch=0,
        grid=(Tp // tm, kt),                                 # reduction axis last
        in_specs=[
            pl.BlockSpec((tm, dim), lambda i, k: (i, 0)),    # x tile
            _weight_spec((dim, tn), lambda i, k: (0, k)),    # w1 tile
            _weight_spec((dim, tn), lambda i, k: (0, k)),    # w3 tile
            _weight_spec((tn, dim), lambda i, k: (k, 0)),    # w2 tile
        ],
        out_specs=pl.BlockSpec((tm, dim), lambda i, k: (i, 0)),
        scratch_shapes=[
            pltpu.VMEM((tm, dim), jnp.float32),              # f32 accumulator
            pltpu.VMEM((tm, tn), w2.dtype),                  # gated activations
        ],
    )

    out = pl.pallas_call(
        partial(_ffn_kernel, chunk=chunk),
        out_shape=jax.ShapeDtypeStruct((Tp, dim), x.dtype),
        grid_spec=grid_spec,
        compiler_params=pltpu.CompilerParams(
            dimension_semantics=("parallel", "arbitrary"),
            vmem_limit_bytes=vmem_limit,
        ),
        interpret=interpret,
    )(xp, w1, w3, w2)
    # TODO(synk): fp8 (v7x) / int8-int4 (v6e) weight storage with in-kernel dequant
    # for the HBM-bound decode regime, and a dual-TensorCore split of the hidden
    # reduction on v7x when there is only a single token tile.
    return out[:T] if Tp != T else out


def feed_forward_ref(x, w1, w3, w2):
    h1 = x @ w1
    h3 = x @ w3
    return ((h1 * jax.nn.sigmoid(h1)) * h3) @ w2


if __name__ == "__main__":
    # Small but lane/MXU-aligned config.
    dim = 128
    multiple_of = 128
    hidden = _llama_hidden_dim(dim, 4 * dim, multiple_of, None)   # -> 384

    batch, seq = 2, 64           # T = 128 tokens
    T = batch * seq
    key = jax.random.PRNGKey(0)
    kx, k1, k2, k3 = jax.random.split(key, 4)

    x = jax.random.normal(kx, (batch, seq, dim), dtype=jnp.float32)
    # PyTorch nn.Linear weight is [out, in]; the kernel stores the transpose [in, out].
    w1 = (jax.random.normal(k1, (hidden, dim), dtype=jnp.float32) / math.sqrt(dim)).T
    w3 = (jax.random.normal(k3, (hidden, dim), dtype=jnp.float32) / math.sqrt(dim)).T
    w2 = (jax.random.normal(k2, (dim, hidden), dtype=jnp.float32) / math.sqrt(hidden)).T

    x2d = x.reshape(T, dim)
    ref = feed_forward_ref(x2d, w1, w3, w2)

    # 1) Forced small tiles: 3-step hidden reduction exercises the accumulator.
    out = jax.block_until_ready(feed_forward(x2d, w1, w3, w2, tm=128, tn=128))
    assert out.shape == (T, dim)
    assert jnp.allclose(out, ref, atol=2e-2, rtol=2e-2), \
        float(jnp.max(jnp.abs(out - ref)))

    # 2) tn that does not divide hidden (384): exercises the hidden-padding path.
    out_pad = jax.block_until_ready(feed_forward(x2d, w1, w3, w2, tm=128, tn=256))
    assert jnp.allclose(out_pad, ref, atol=2e-2, rtol=2e-2), \
        float(jnp.max(jnp.abs(out_pad - ref)))

    # 3) Auto-tiled config (generation/VMEM-derived tm, tn).
    out_auto = jax.block_until_ready(feed_forward(x2d, w1, w3, w2))
    assert jnp.allclose(out_auto, ref, atol=2e-2, rtol=2e-2), \
        float(jnp.max(jnp.abs(out_auto - ref)))

    # 4) bf16 activations/weights (native MXU dtype, f32 accumulation in-kernel).
    out_bf16 = feed_forward(x2d.astype(jnp.bfloat16), w1.astype(jnp.bfloat16),
                            w3.astype(jnp.bfloat16), w2.astype(jnp.bfloat16))
    out_bf16 = jax.block_until_ready(out_bf16).astype(jnp.float32)
    assert jnp.allclose(out_bf16, ref, atol=1e-1, rtol=1e-1), \
        float(jnp.max(jnp.abs(out_bf16 - ref)))

    print("KERNEL_OK")
</pallas_src>

<mosaic_0001>
module attributes {stable_mosaic.version = 11 : i64} {
  func.func @_ffn_kernel(%arg0: i32, %arg1: i32, %arg2: memref<128x128xf32, #tpu.memory_space<vmem>>, %arg3: memref<128x128xf32, #tpu.memory_space<vmem>>, %arg4: memref<128x128xf32, #tpu.memory_space<vmem>>, %arg5: memref<128x128xf32, #tpu.memory_space<vmem>>, %arg6: memref<128x128xf32, #tpu.memory_space<vmem>>, %arg7: memref<128x128xf32, #tpu.memory_space<vmem>>, %arg8: memref<128x128xf32, #tpu.memory_space<vmem>>) attributes {dimension_semantics = [#tpu.dimension_semantics<parallel>, #tpu.dimension_semantics<arbitrary>], iteration_bounds = array<i64: 1, 3>, scalar_prefetch = 0 : i64, scratch_operands = 2 : i64, tpu.core_type = #tpu.core_type<tc>, window_params = [{transform_indices = @transform_0, window_bounds = array<i64: 128, 128>}, {transform_indices = @transform_1, window_bounds = array<i64: 128, 128>}, {transform_indices = @transform_2, window_bounds = array<i64: 128, 128>}, {transform_indices = @transform_3, window_bounds = array<i64: 128, 128>}, {transform_indices = @transform_4, window_bounds = array<i64: 128, 128>}]} {
    %c0_i32 = arith.constant 0 : i32
    %0 = arith.cmpi eq, %arg1, %c0_i32 : i32
    %1 = arith.extui %0 : i1 to i32
    %c0_i32_0 = arith.constant 0 : i32
    %2 = arith.cmpi ne, %1, %c0_i32_0 : i32
    scf.if %2 {
      %cst_20 = arith.constant 0.000000e+00 : f32
      %25 = vector.broadcast %cst_20 : f32 to vector<128x128xf32>
      %c0_21 = arith.constant 0 : index
      %c0_22 = arith.constant 0 : index
      %26 = vector.load %arg7[%c0_21, %c0_22] : memref<128x128xf32, #tpu.memory_space<vmem>>, vector<128x128xf32>
      tpu.vector_store %arg7[%c0_21, %c0_22], %25 {strides = array<i32>} : memref<128x128xf32, #tpu.memory_space<vmem>>, vector<128x128xf32>,
    } else {
    }
    %c0 = arith.constant 0 : index
    %c0_1 = arith.constant 0 : index
    %3 = vector.load %arg2[%c0, %c0_1] : memref<128x128xf32, #tpu.memory_space<vmem>>, vector<128x128xf32>
    %c0_2 = arith.constant 0 : index
    %c0_3 = arith.constant 0 : index
    %4 = vector.load %arg3[%c0_2, %c0_3] : memref<128x128xf32, #tpu.memory_space<vmem>>, vector<128x128xf32>
    %cst = arith.constant dense<0.000000e+00> : vector<128x128xf32>
    %5 = tpu.matmul %3, %4, %cst {dimension_numbers = #tpu.dot_dimension_numbers<[1], [0], [0], [1], [0, 0, 1, 1], [], []>} : vector<128x128xf32>, vector<128x128xf32>, vector<128x128xf32> -> vector<128x128xf32>
    %c0_4 = arith.constant 0 : index
    %c0_5 = arith.constant 0 : index
    %6 = vector.load %arg4[%c0_4, %c0_5] : memref<128x128xf32, #tpu.memory_space<vmem>>, vector<128x128xf32>
    %cst_6 = arith.constant dense<0.000000e+00> : vector<128x128xf32>
    %7 = tpu.matmul %3, %6, %cst_6 {dimension_numbers = #tpu.dot_dimension_numbers<[1], [0], [0], [1], [0, 0, 1, 1], [], []>} : vector<128x128xf32>, vector<128x128xf32>, vector<128x128xf32> -> vector<128x128xf32>
    %8 = arith.negf %5 : vector<128x128xf32>
    %9 = math.exp %8 : vector<128x128xf32>
    %cst_7 = arith.constant 1.000000e+00 : f32
    %10 = vector.broadcast %cst_7 : f32 to vector<128x128xf32>
    %11 = arith.addf %10, %9 : vector<128x128xf32>
    %12 = arith.divf %10, %11 : vector<128x128xf32>
    %13 = arith.mulf %5, %12 : vector<128x128xf32>
    %14 = arith.mulf %13, %7 : vector<128x128xf32>
    %c0_8 = arith.constant 0 : index
    %c0_9 = arith.constant 0 : index
    %15 = vector.load %arg8[%c0_8, %c0_9] : memref<128x128xf32, #tpu.memory_space<vmem>>, vector<128x128xf32>
    tpu.vector_store %arg8[%c0_8, %c0_9], %14 {strides = array<i32>} : memref<128x128xf32, #tpu.memory_space<vmem>>, vector<128x128xf32>,
    %c0_10 = arith.constant 0 : index
    %c0_11 = arith.constant 0 : index
    %16 = vector.load %arg7[%c0_10, %c0_11] : memref<128x128xf32, #tpu.memory_space<vmem>>, vector<128x128xf32>
    %c0_12 = arith.constant 0 : index
    %c0_13 = arith.constant 0 : index
    %17 = vector.load %arg8[%c0_12, %c0_13] : memref<128x128xf32, #tpu.memory_space<vmem>>, vector<128x128xf32>
    %c0_14 = arith.constant 0 : index
    %c0_15 = arith.constant 0 : index
    %18 = vector.load %arg5[%c0_14, %c0_15] : memref<128x128xf32, #tpu.memory_space<vmem>>, vector<128x128xf32>
    %cst_16 = arith.constant dense<0.000000e+00> : vector<128x128xf32>
    %19 = tpu.matmul %17, %18, %cst_16 {dimension_numbers = #tpu.dot_dimension_numbers<[1], [0], [0], [1], [0, 0, 1, 1], [], []>} : vector<128x128xf32>, vector<128x128xf32>, vector<128x128xf32> -> vector<128x128xf32>
    %20 = arith.addf %16, %19 : vector<128x128xf32>
    %c0_17 = arith.constant 0 : index
    %c0_18 = arith.constant 0 : index
    %21 = vector.load %arg7[%c0_17, %c0_18] : memref<128x128xf32, #tpu.memory_space<vmem>>, vector<128x128xf32>
    tpu.vector_store %arg7[%c0_17, %c0_18], %20 {strides = array<i32>} : memref<128x128xf32, #tpu.memory_space<vmem>>, vector<128x128xf32>,
    %c2_i32 = arith.constant 2 : i32
    %22 = arith.cmpi eq, %arg1, %c2_i32 : i32
    %23 = arith.extui %22 : i1 to i32
    %c0_i32_19 = arith.constant 0 : i32
    %24 = arith.cmpi ne, %23, %c0_i32_19 : i32
    scf.if %24 {
      %c0_20 = arith.constant 0 : index
      %c0_21 = arith.constant 0 : index
      %25 = vector.load %arg7[%c0_20, %c0_21] : memref<128x128xf32, #tpu.memory_space<vmem>>, vector<128x128xf32>
      %c0_22 = arith.constant 0 : index
      %c0_23 = arith.constant 0 : index
      %26 = vector.load %arg6[%c0_22, %c0_23] : memref<128x128xf32, #tpu.memory_space<vmem>>, vector<128x128xf32>
      tpu.vector_store %arg6[%c0_22, %c0_23], %25 {strides = array<i32>} : memref<128x128xf32, #tpu.memory_space<vmem>>, vector<128x128xf32>,
    } else {
    }
    return
  }
  func.func @transform_0(%arg0: i32, %arg1: i32) -> (i32, i32) {
    %c0_i32 = arith.constant 0 : i32
    %c0_i32_0 = arith.constant 0 : i32
    return %arg0, %c0_i32 : i32, i32
  }
  func.func @transform_1(%arg0: i32, %arg1: i32) -> (i32, i32) {
    %c0_i32 = arith.constant 0 : i32
    %c0_i32_0 = arith.constant 0 : i32
    return %c0_i32, %arg1 : i32, i32
  }
  func.func @transform_2(%arg0: i32, %arg1: i32) -> (i32, i32) {
    %c0_i32 = arith.constant 0 : i32
    %c0_i32_0 = arith.constant 0 : i32
    return %c0_i32, %arg1 : i32, i32
  }
  func.func @transform_3(%arg0: i32, %arg1: i32) -> (i32, i32) {
    %c0_i32 = arith.constant 0 : i32
    %c0_i32_0 = arith.constant 0 : i32
    return %arg1, %c0_i32 : i32, i32
  }
  func.func @transform_4(%arg0: i32, %arg1: i32) -> (i32, i32) {
    %c0_i32 = arith.constant 0 : i32
    %c0_i32_0 = arith.constant 0 : i32
    return %arg0, %c0_i32 : i32, i32
  }
}

</mosaic_0001>

<llo_original>
// kernel: tpu_custom_call.1
$region0: #{tpu_custom_call.1}
  #allocation0 [shape = 'u32[]', space=smem, size = 0x4, offset = 0x4, fixed_abs, tag = 'smem constant byte address 0x4 - core index']
  #allocation1 [shape = 'u32[144,128]{1,0:T(1,128)}', space=vmem, size = 0x12000, scoped, tag = 'internal scratch']
  #allocation2 [shape = 'f32[128,128]{1,0:T(8,128)}', space=vmem, size = 0x10000, scoped, tag = 'scratch operand']
  #allocation3 [shape = 'f32[128,128]{1,0:T(8,128)}', space=vmem, size = 0x10000, scoped, tag = 'scratch operand']
  %s0 = inlined_call_operand.hbm [shape: f32[128,128], index: 0, kind: input, shape index: {}]
  %s1 = inlined_call_operand.hbm [shape: f32[128,384], index: 1, kind: input, shape index: {}]
  %s2 = inlined_call_operand.hbm [shape: f32[128,384], index: 2, kind: input, shape index: {}]
  %s3 = inlined_call_operand.hbm [shape: f32[384,128], index: 3, kind: input, shape index: {}]
  %s4 = inlined_call_operand.hbm [shape: f32[128,128], index: 4, kind: output, shape index: {}]
  %s5 = sld [smem:[#allocation0]]
  $region73: #{tpu_custom_call.1} parent=0
    _
  %s7 = ssub.s32 1, %s5
  %s8 = scalar_select 0, %s7, %s5
  $region1: #{tpu_custom_call.1} parent=0
    #allocation4 [shape = 'u8[65536]{0}', space=vmem, size = 0x10000, scoped, tag = 'input window, operand 0, single buffered']
    #allocation5 [shape = 's32[2]{0}', space=sflag, size = 0x8, scoped, tag = 'scoped memory for tpu_custom_call.1']
    #allocation6 [shape = 's32[2]{0}', space=sflag, size = 0x8, scoped, tag = 'scoped memory for tpu_custom_call.1']
    #allocation7 [shape = 'u8[131072]{0}', space=vmem, size = 0x20000, scoped, tag = 'input window, operand 1']
    #allocation8 [shape = 's32[2]{0}', space=sflag, size = 0x8, scoped, tag = 'scoped memory for tpu_custom_call.1']
    #allocation9 [shape = 'u8[131072]{0}', space=vmem, size = 0x20000, scoped, tag = 'input window, operand 2']
    #allocation10 [shape = 'u8[131072]{0}', space=vmem, size = 0x20000, scoped, tag = 'input window, operand 3']
    #allocation11 [shape = 's32[2]{0}', space=sflag, size = 0x8, scoped, tag = 'scoped memory for tpu_custom_call.1']
    #allocation12 [shape = 'u8[65536]{0}', space=vmem, size = 0x10000, scoped, tag = 'output window, operand 0, single buffered']
    %9 = vsyncpa [#allocation5], 0
    %10 = vsyncpa [#allocation8], 0
    %s11 = scalar_lea.sflag [#allocation8], 1
    %12 = vsyncpa %s11, 0
    %13 = vsyncpa [#allocation11], 0
    %s14 = scalar_lea.sflag [#allocation11], 1
    %15 = vsyncpa %s14, 0
    %16 = vsyncpa [#allocation6], 0
    loop: start=0, step=1, limit=5
    $region2: #{tpu_custom_call.1} parent=1 // loop_pre_header
      _
    $region3: #{tpu_custom_call.1} parent=1 // loop_header
      %s18 = sphi 0, %s22
      %p19 = scmp.ge.s32.totalorder %s18, 5
      %s25 = sphi 0, %s37
      %s26 = sphi 0, %s33
      %s27 = sphi 0, %s25
      %s28 = sphi 0, %s26
      %s29 = sphi 0, %s27
      %s30 = sphi 0, %s28
      %s40 = sphi 0, %s42
      %s43 = sphi 0, %s40
      %s44 = sphi 0, %s43
      %s60 = sphi 0, %s44
      %s66 = sphi 0, %s68
      %s69 = sphi 0, %s66
      %s70 = sphi 0, %s69
      %s86 = sphi 0, %s70
      %s92 = sphi 0, %s94
      %s95 = sphi 0, %s92
      %s96 = sphi 0, %s95
      %s112 = sphi 0, %s96
      %s118 = sphi 0, %s120
      %s121 = sphi 0, %s118
      %s122 = sphi 0, %s121
      %s138 = sphi 0, %s122
      %s144 = sphi 0, %s146
      %s147 = sphi 0, %s144
      %s148 = sphi 0, %s147
      %s164 = sphi 0, %s148
    $region4: #{tpu_custom_call.1} parent=1 // loop_header_branch
      %21 = sbr.rel (%p19) target = $region8
    $region5: #{tpu_custom_call.1} parent=1 // loop_body
      %s23 = ssub.s32 %s18, 1
      %s24 = ssub.s32 %s18, 2
      %s31 = sadd.s32 1, %s26
      %p32 = scmp.ge.s32.totalorder %s31, 3
      %s33 = scalar_select %p32, 0, %s31
      %s34 = sadd.s32 1, %s25
      %s35 = scalar_select %p32, %s34, %s25
      %p36 = scmp.ge.s32.totalorder %s35, 1
      %s37 = scalar_select %p36, 0, %s35
      %s38 = ssub.s32 %s25, %s37
      %p39 = scmp.eq.s32.totalorder %s38, 0
      %s41 = sadd.s32 %s40, 1
      %s42 = scalar_select %p39, %s40, %s41
      %p45 = pneg %p39
      %p46 = scmp.eq.s32.totalorder %s18, 2
      %p47 = por %p45, %p46
      %p48 = scmp.ne.s32.totalorder %s40, %s43
      %p49 = scmp.eq.s32.totalorder %s18, 0
      %p50 = por %p48, %p49
      %p51 = scmp.ne.s32.totalorder %s40, %s43
      %p52 = scmp.eq.s32.totalorder %s23, 2
      %p53 = por %p51, %p52
      %p54 = scmp.ne.s32.totalorder %s43, %s44
      %p55 = scmp.eq.s32.totalorder %s23, 0
      %p56 = por %p54, %p55
      %p57 = scmp.ne.s32.totalorder %s43, %s44
      %p58 = scmp.eq.s32.totalorder %s24, 2
      %p59 = por %p57, %p58
      %p61 = scmp.ne.s32.totalorder %s44, %s60
      %p62 = scmp.eq.s32.totalorder %s24, 0
      %p63 = por %p61, %p62
      %s64 = ssub.s32 %s26, %s33
      %p65 = scmp.eq.s32.totalorder %s64, 0
      %s67 = sadd.s32 %s66, 1
      %s68 = scalar_select %p65, %s66, %s67
      %p71 = pneg %p65
      %p72 = scmp.eq.s32.totalorder %s18, 2
      %p73 = por %p71, %p72
      %p74 = scmp.ne.s32.totalorder %s66, %s69
      %p75 = scmp.eq.s32.totalorder %s18, 0
      %p76 = por %p74, %p75
      %p77 = scmp.ne.s32.totalorder %s66, %s69
      %p78 = scmp.eq.s32.totalorder %s23, 2
      %p79 = por %p77, %p78
      %p80 = scmp.ne.s32.totalorder %s69, %s70
      %p81 = scmp.eq.s32.totalorder %s23, 0
      %p82 = por %p80, %p81
      %p83 = scmp.ne.s32.totalorder %s69, %s70
      %p84 = scmp.eq.s32.totalorder %s24, 2
      %p85 = por %p83, %p84
      %p87 = scmp.ne.s32.totalorder %s70, %s86
      %p88 = scmp.eq.s32.totalorder %s24, 0
      %p89 = por %p87, %p88
      %s90 = ssub.s32 %s26, %s33
      %p91 = scmp.eq.s32.totalorder %s90, 0
      %s93 = sadd.s32 %s92, 1
      %s94 = scalar_select %p91, %s92, %s93
      %p97 = pneg %p91
      %p98 = scmp.eq.s32.totalorder %s18, 2
      %p99 = por %p97, %p98
      %p100 = scmp.ne.s32.totalorder %s92, %s95
      %p101 = scmp.eq.s32.totalorder %s18, 0
      %p102 = por %p100, %p101
      %p103 = scmp.ne.s32.totalorder %s92, %s95
      %p104 = scmp.eq.s32.totalorder %s23, 2
      %p105 = por %p103, %p104
      %p106 = scmp.ne.s32.totalorder %s95, %s96
      %p107 = scmp.eq.s32.totalorder %s23, 0
      %p108 = por %p106, %p107
      %p109 = scmp.ne.s32.totalorder %s95, %s96
      %p110 = scmp.eq.s32.totalorder %s24, 2
      %p111 = por %p109, %p110
      %p113 = scmp.ne.s32.totalorder %s96, %s112
      %p114 = scmp.eq.s32.totalorder %s24, 0
      %p115 = por %p113, %p114
      %s116 = ssub.s32 %s26, %s33
      %p117 = scmp.eq.s32.totalorder %s116, 0
      %s119 = sadd.s32 %s118, 1
      %s120 = scalar_select %p117, %s118, %s119
      %p123 = pneg %p117
      %p124 = scmp.eq.s32.totalorder %s18, 2
      %p125 = por %p123, %p124
      %p126 = scmp.ne.s32.totalorder %s118, %s121
      %p127 = scmp.eq.s32.totalorder %s18, 0
      %p128 = por %p126, %p127
      %p129 = scmp.ne.s32.totalorder %s118, %s121
      %p130 = scmp.eq.s32.totalorder %s23, 2
      %p131 = por %p129, %p130
      %p132 = scmp.ne.s32.totalorder %s121, %s122
      %p133 = scmp.eq.s32.totalorder %s23, 0
      %p134 = por %p132, %p133
      %p135 = scmp.ne.s32.totalorder %s121, %s122
      %p136 = scmp.eq.s32.totalorder %s24, 2
      %p137 = por %p135, %p136
      %p139 = scmp.ne.s32.totalorder %s122, %s138
      %p140 = scmp.eq.s32.totalorder %s24, 0
      %p141 = por %p139, %p140
      %s142 = ssub.s32 %s25, %s37
      %p143 = scmp.eq.s32.totalorder %s142, 0
      %s145 = sadd.s32 %s144, 1
      %s146 = scalar_select %p143, %s144, %s145
      %p149 = pneg %p143
      %p150 = scmp.eq.s32.totalorder %s18, 2
      %p151 = por %p149, %p150
      %p152 = scmp.ne.s32.totalorder %s144, %s147
      %p153 = scmp.eq.s32.totalorder %s18, 0
      %p154 = por %p152, %p153
      %p155 = scmp.ne.s32.totalorder %s144, %s147
      %p156 = scmp.eq.s32.totalorder %s23, 2
      %p157 = por %p155, %p156
      %p158 = scmp.ne.s32.totalorder %s147, %s148
      %p159 = scmp.eq.s32.totalorder %s23, 0
      %p160 = por %p158, %p159
      %p161 = scmp.ne.s32.totalorder %s147, %s148
      %p162 = scmp.eq.s32.totalorder %s24, 2
      %p163 = por %p161, %p162
      %p165 = scmp.ne.s32.totalorder %s148, %s164
      %p166 = scmp.eq.s32.totalorder %s24, 0
      %p167 = por %p165, %p166
      %p168 = scmp.le.s32.totalorder 1, %s18
      %p169 = scmp.lt.s32.totalorder %s18, 4
      %p170 = pnand %p168, %p169
      %p171 = pneg %p170
      // Predicated region
      $region9: #{tpu_custom_call.1} parent=5 // pred_check
        _
      $region10: #{tpu_custom_call.1} parent=5 // pred_check_branch
        %173 = sbr.rel (%p170) target = $region12
      $region11: #{tpu_custom_call.1} parent=5 // pred_region
        %s174 = ssub.s32 %s18, 1
        // Predicated region
        $region13: #{tpu_custom_call.1} parent=11 // pred_check
          %p175 = pneg %p56
        $region14: #{tpu_custom_call.1} parent=11 // pred_check_branch
          %177 = sbr.rel (%p175) target = $region16
        $region15: #{tpu_custom_call.1} parent=11 // pred_region
          %s178 = smul.u32 16, %s27
          %s180 = ssub.s32 2048, 2048
          %181 = vsyncadd [#allocation5], %s180
          %s182 = smul.addr %s178, 128
          %s183 = scalar_lea.hbm %s0, %s182
          %s184 = sshll.u32 [#allocation4], 4
          %s185 = int_to_ptr.vmem [resolvable:$true] %s184
          %190 = dma.hbm_to_vmem [thread:$0]  %s183, 2048, %s185, [#allocation5], 128, 128, 8
        $region16: #{tpu_custom_call.1} parent=11 // pred_fallthru
          _
      $region12: #{tpu_custom_call.1} parent=5 // pred_fallthru
        _
      %p191 = scmp.lt.s32.totalorder %s18, 3
      // Predicated region
      $region17: #{tpu_custom_call.1} parent=5 // pred_check
        %p192 = pneg %p191
      $region18: #{tpu_custom_call.1} parent=5 // pred_check_branch
        %194 = sbr.rel (%p192) target = $region20
      $region19: #{tpu_custom_call.1} parent=5 // pred_region
        // Predicated region
        $region21: #{tpu_custom_call.1} parent=19 // pred_check
          %p195 = pneg %p76
        $region22: #{tpu_custom_call.1} parent=19 // pred_check_branch
          %197 = sbr.rel (%p195) target = $region24
        $region23: #{tpu_custom_call.1} parent=19 // pred_region
          %s198 = sand.u32 %s18, 1
          %s199 = scalar_lea.sflag [#allocation8], %s198
          %s200 = sand.u32 %s66, 1
          %s201 = smul.addr %s200, 128
          %s202 = scalar_lea.vmem [#allocation7], %s201
          %s204 = ssub.s32 2048, 2048
          %205 = vsyncadd %s199, %s204
          %s206 = smul.addr %s26, 128
          %s207 = scalar_lea.hbm %s1, %s206
          %s208 = sshll.u32 %s202, 4
          %s209 = int_to_ptr.vmem [resolvable:$true] %s208
          %214 = dma.hbm_to_vmem [thread:$0]  %s207, 2048, %s209, %s199, 384, 128, 8
        $region24: #{tpu_custom_call.1} parent=19 // pred_fallthru
          _
        // Predicated region
        $region25: #{tpu_custom_call.1} parent=19 // pred_check
          %p215 = pneg %p102
        $region26: #{tpu_custom_call.1} parent=19 // pred_check_branch
          %217 = sbr.rel (%p215) target = $region28
        $region27: #{tpu_custom_call.1} parent=19 // pred_region
          %s218 = sand.u32 %s18, 1
          %s219 = scalar_lea.sflag [#allocation8], %s218
          %s220 = sand.u32 %s92, 1
          %s221 = smul.addr %s220, 128
          %s222 = scalar_lea.vmem [#allocation9], %s221
          %s224 = ssub.s32 2048, 2048
          %225 = vsyncadd %s219, %s224
          %s226 = smul.addr %s26, 128
          %s227 = scalar_lea.hbm %s2, %s226
          %s228 = sshll.u32 %s222, 4
          %s229 = int_to_ptr.vmem [resolvable:$true] %s228
          %234 = dma.hbm_to_vmem [thread:$0]  %s227, 2048, %s229, %s219, 384, 128, 8
        $region28: #{tpu_custom_call.1} parent=19 // pred_fallthru
          _
        // Predicated region
        $region29: #{tpu_custom_call.1} parent=19 // pred_check
          %p235 = pneg %p128
        $region30: #{tpu_custom_call.1} parent=19 // pred_check_branch
          %237 = sbr.rel (%p235) target = $region32
        $region31: #{tpu_custom_call.1} parent=19 // pred_region
          %s238 = sand.u32 %s118, 1
          %s239 = scalar_lea.sflag [#allocation11], %s238
          %s240 = sand.u32 %s118, 1
          %s241 = smul.addr %s240, 128
          %s242 = scalar_lea.vmem [#allocation10], %s241
          %s243 = smul.u32 16, %s26
          %s245 = ssub.s32 2048, 2048
          %246 = vsyncadd %s239, %s245
          %s247 = smul.addr %s243, 128
          %s248 = scalar_lea.hbm %s3, %s247
          %s249 = sshll.u32 %s242, 4
          %s250 = int_to_ptr.vmem [resolvable:$true] %s249
          %255 = dma.hbm_to_vmem [thread:$0]  %s248, 2048, %s250, %s239, 128, 128, 8
        $region32: #{tpu_custom_call.1} parent=19 // pred_fallthru
          _
      $region20: #{tpu_custom_call.1} parent=5 // pred_fallthru
        _
      %p256 = scmp.le.s32.totalorder 1, %s18
      %p257 = scmp.lt.s32.totalorder %s18, 4
      %p258 = pnand %p256, %p257
      %p259 = pneg %p258
      // Predicated region
      $region33: #{tpu_custom_call.1} parent=5 // pred_check
        _
      $region34: #{tpu_custom_call.1} parent=5 // pred_check_branch
        %261 = sbr.rel (%p258) target = $region36
      $region35: #{tpu_custom_call.1} parent=5 // pred_region
        %s262 = ssub.s32 %s18, 1
        // Predicated region
        $region37: #{tpu_custom_call.1} parent=35 // pred_check
          %p263 = pneg %p56
        $region38: #{tpu_custom_call.1} parent=35 // pred_check_branch
          %265 = sbr.rel (%p263) target = $region40
        $region39: #{tpu_custom_call.1} parent=35 // pred_region
          %266 = dma.done [#allocation5], 2048
        $region40: #{tpu_custom_call.1} parent=35 // pred_fallthru
          _
        %s267 = sand.u32 %s23, 1
        %s268 = scalar_lea.sflag [#allocation8], %s267
        %s269 = sand.u32 %s69, 1
        %s270 = smul.addr %s269, 128
        %s271 = scalar_lea.vmem [#allocation7], %s270
        // Predicated region
        $region41: #{tpu_custom_call.1} parent=35 // pred_check
          %p272 = pneg %p82
        $region42: #{tpu_custom_call.1} parent=35 // pred_check_branch
          %274 = sbr.rel (%p272) target = $region44
        $region43: #{tpu_custom_call.1} parent=35 // pred_region
          %275 = dma.done %s268, 2048
        $region44: #{tpu_custom_call.1} parent=35 // pred_fallthru
          _
        %s276 = sand.u32 %s23, 1
        %s277 = scalar_lea.sflag [#allocation8], %s276
        %s278 = sand.u32 %s95, 1
        %s279 = smul.addr %s278, 128
        %s280 = scalar_lea.vmem [#allocation9], %s279
        // Predicated region
        $region45: #{tpu_custom_call.1} parent=35 // pred_check
          %p281 = pneg %p108
        $region46: #{tpu_custom_call.1} parent=35 // pred_check_branch
          %283 = sbr.rel (%p281) target = $region48
        $region47: #{tpu_custom_call.1} parent=35 // pred_region
          %284 = dma.done %s277, 2048
        $region48: #{tpu_custom_call.1} parent=35 // pred_fallthru
          _
        %s285 = sand.u32 %s121, 1
        %s286 = scalar_lea.sflag [#allocation11], %s285
        %s287 = sand.u32 %s121, 1
        %s288 = smul.addr %s287, 128
        %s289 = scalar_lea.vmem [#allocation10], %s288
        // Predicated region
        $region49: #{tpu_custom_call.1} parent=35 // pred_check
          %p290 = pneg %p134
        $region50: #{tpu_custom_call.1} parent=35 // pred_check_branch
          %292 = sbr.rel (%p290) target = $region52
        $region51: #{tpu_custom_call.1} parent=35 // pred_region
          %293 = dma.done %s286, 2048
        $region52: #{tpu_custom_call.1} parent=35 // pred_fallthru
          _
        %p294 = pneg %p56
        %p295 = pneg %p53
        %s296 = sand.u32 %s23, 1
        %s297 = scalar_lea.sflag [#allocation8], %s296
        %s298 = sand.u32 %s69, 1
        %s299 = smul.addr %s298, 128
        %s300 = scalar_lea.vmem [#allocation7], %s299
        %p301 = pneg %p82
        %p302 = pneg %p79
        %s303 = sand.u32 %s23, 1
        %s304 = scalar_lea.sflag [#allocation8], %s303
        %s305 = sand.u32 %s95, 1
        %s306 = smul.addr %s305, 128
        %s307 = scalar_lea.vmem [#allocation9], %s306
        %p308 = pneg %p108
        %p309 = pneg %p105
        %s310 = sand.u32 %s121, 1
        %s311 = scalar_lea.sflag [#allocation11], %s310
        %s312 = sand.u32 %s121, 1
        %s313 = smul.addr %s312, 128
        %s314 = scalar_lea.vmem [#allocation10], %s313
        %p315 = pneg %p134
        %p316 = pneg %p131
        %p317 = pneg %p160
        %p318 = pneg %p157
        %s319 = smul.u32 16, %s27
        %s320 = smul.u32 16, %s28
        %s321 = smul.u32 16, %s27
        %p322 = scmp.eq.s32.totalorder %s28, 0
        // Predicated region
        $region53: #{tpu_custom_call.1} parent=35 // pred_check
          %p323 = pneg %p322
        $region54: #{tpu_custom_call.1} parent=35 // pred_check_branch
          %325 = sbr.rel (%p323) target = $region56
        $region55: #{tpu_custom_call.1} parent=35 // pred_region
          %326 = vst [vmem:[#allocation2] sm:$0xff] 0.0
          %327 = vst [vmem:[#allocation2 + $0x8] sm:$0xff] 0.0
          %328 = vst [vmem:[#allocation2 + $0x10] sm:$0xff] 0.0
          %329 = vst [vmem:[#allocation2 + $0x18] sm:$0xff] 0.0
          %330 = vst [vmem:[#allocation2 + $0x20] sm:$0xff] 0.0
          %331 = vst [vmem:[#allocation2 + $0x28] sm:$0xff] 0.0
          %332 = vst [vmem:[#allocation2 + $0x30] sm:$0xff] 0.0
          %333 = vst [vmem:[#allocation2 + $0x38] sm:$0xff] 0.0
          %334 = vst [vmem:[#allocation2 + $0x40] sm:$0xff] 0.0
          %335 = vst [vmem:[#allocation2 + $0x48] sm:$0xff] 0.0
          %336 = vst [vmem:[#allocation2 + $0x50] sm:$0xff] 0.0
          %337 = vst [vmem:[#allocation2 + $0x58] sm:$0xff] 0.0
          %338 = vst [vmem:[#allocation2 + $0x60] sm:$0xff] 0.0
          %339 = vst [vmem:[#allocation2 + $0x68] sm:$0xff] 0.0
          %340 = vst [vmem:[#allocation2 + $0x70] sm:$0xff] 0.0
          %341 = vst [vmem:[#allocation2 + $0x78] sm:$0xff] 0.0
        $region56: #{tpu_custom_call.1} parent=35 // pred_fallthru
          _
        %v342 = vld [vmem:[#allocation4] sm:$0xff]
        %v343 = vld [vmem:[#allocation4 + $0x8] sm:$0xff]
        %v344 = vld [vmem:[#allocation4 + $0x10] sm:$0xff]
        %v345 = vld [vmem:[#allocation4 + $0x18] sm:$0xff]
        %v346 = vld [vmem:[#allocation4 + $0x20] sm:$0xff]
        %v347 = vld [vmem:[#allocation4 + $0x28] sm:$0xff]
        %v348 = vld [vmem:[#allocation4 + $0x30] sm:$0xff]
        %v349 = vld [vmem:[#allocation4 + $0x38] sm:$0xff]
        %v350 = vld [vmem:[#allocation4 + $0x40] sm:$0xff]
        %v351 = vld [vmem:[#allocation4 + $0x48] sm:$0xff]
        %v352 = vld [vmem:[#allocation4 + $0x50] sm:$0xff]
        %v353 = vld [vmem:[#allocation4 + $0x58] sm:$0xff]
        %v354 = vld [vmem:[#allocation4 + $0x60] sm:$0xff]
        %v355 = vld [vmem:[#allocation4 + $0x68] sm:$0xff]
        %v356 = vld [vmem:[#allocation4 + $0x70] sm:$0xff]
        %v357 = vld [vmem:[#allocation4 + $0x78] sm:$0xff]
        %v358 = vld [vmem:[%s271] sm:$0xff]
        %v359 = vld [vmem:[%s271 + $0x8] sm:$0xff]
        %v360 = vld [vmem:[%s271 + $0x10] sm:$0xff]
        %v361 = vld [vmem:[%s271 + $0x18] sm:$0xff]
        %v362 = vld [vmem:[%s271 + $0x20] sm:$0xff]
        %v363 = vld [vmem:[%s271 + $0x28] sm:$0xff]
        %v364 = vld [vmem:[%s271 + $0x30] sm:$0xff]
        %v365 = vld [vmem:[%s271 + $0x38] sm:$0xff]
        %v366 = vld [vmem:[%s271 + $0x40] sm:$0xff]
        %v367 = vld [vmem:[%s271 + $0x48] sm:$0xff]
        %v368 = vld [vmem:[%s271 + $0x50] sm:$0xff]
        %v369 = vld [vmem:[%s271 + $0x58] sm:$0xff]
        %v370 = vld [vmem:[%s271 + $0x60] sm:$0xff]
        %v371 = vld [vmem:[%s271 + $0x68] sm:$0xff]
        %v372 = vld [vmem:[%s271 + $0x70] sm:$0xff]
        %v373 = vld [vmem:[%s271 + $0x78] sm:$0xff]
        %374 = vmatprep.subr.mxu0 0.0
        %375 = vmatpush1.msra.mxu0 %v358
        %376 = vmatprep.subr.mxu0 0.0
        %377 = vmatpush1.msra.mxu0 %v359
        %378 = vmatprep.subr.mxu0 0.0
        %379 = vmatpush1.msra.mxu0 %v360
        %380 = vmatprep.subr.mxu0 0.0
        %381 = vmatpush1.msra.mxu0 %v361
        %382 = vmatprep.subr.mxu0 0.0
        %383 = vmatpush1.msra.mxu0 %v362
        %384 = vmatprep.subr.mxu0 0.0
        %385 = vmatpush1.msra.mxu0 %v363
        %386 = vmatprep.subr.mxu0 0.0
        %387 = vmatpush1.msra.mxu0 %v364
        %388 = vmatprep.subr.mxu0 0.0
        %389 = vmatpush1.msra.mxu0 %v365
        %390 = vmatprep.subr.mxu0 0.0
        %391 = vmatpush1.msra.mxu0 %v366
        %392 = vmatprep.subr.mxu0 0.0
        %393 = vmatpush1.msra.mxu0 %v367
        %394 = vmatprep.subr.mxu0 0.0
        %395 = vmatpush1.msra.mxu0 %v368
        %396 = vmatprep.subr.mxu0 0.0
        %397 = vmatpush1.msra.mxu0 %v369
        %398 = vmatprep.subr.mxu0 0.0
        %399 = vmatpush1.msra.mxu0 %v370
        %400 = vmatprep.subr.mxu0 0.0
        %401 = vmatpush1.msra.mxu0 %v371
        %402 = vmatprep.subr.mxu0 0.0
        %403 = vmatpush1.msra.mxu0 %v372
        %404 = vmatprep.subr.mxu0 0.0
        %405 = vmatpush1.msra.mxu0 %v373
        %406 = vmatprep.subr.mxu0 0.0
        %407 = vmatpush1.msra.mxu0 0.0
        %408 = vmatprep.subr.mxu0 0.0
        %409 = vmatpush1.msra.mxu0 0.0
        %410 = vmatprep.subr.mxu0 0.0
        %411 = vmatpush1.msra.mxu0 0.0
        %412 = vmatprep.subr.mxu0 0.0
        %413 = vmatpush1.msra.mxu0 0.0
        %414 = vmatprep.subr.mxu0 0.0
        %415 = vmatpush1.msra.mxu0 0.0
        %416 = vmatprep.subr.mxu0 0.0
        %417 = vmatpush1.msra.mxu0 0.0
        %418 = vmatprep.subr.mxu0 0.0
        %419 = vmatpush1.msra.mxu0 0.0
        %420 = vmatprep.subr.mxu0 0.0
        %421 = vmatpush1.msra.mxu0 0.0
        %422 = vmatprep.subr.mxu0 0.0
        %423 = vmatpush1.msra.mxu0 0.0
        %424 = vmatprep.subr.mxu0 0.0
        %425 = vmatpush1.msra.mxu0 0.0
        %426 = vmatprep.subr.mxu0 0.0
        %427 = vmatpush1.msra.mxu0 0.0
        %428 = vmatprep.subr.mxu0 0.0
        %429 = vmatpush1.msra.mxu0 0.0
        %430 = vmatprep.subr.mxu0 0.0
        %431 = vmatpush1.msra.mxu0 0.0
        %432 = vmatprep.subr.mxu0 0.0
        %433 = vmatpush1.msra.mxu0 0.0
        %434 = vmatprep.subr.mxu0 0.0
        %435 = vmatpush1.msra.mxu0 0.0
        %436 = vmatprep.subr.mxu0 0.0
        %437 = vmatpush1.msra.mxu0 0.0
        %438 = vmatprep.mubr.f32.mxu0 0.0
        %439 = vmatmul.mubr.f32.gmra.mrb[0].mxu0 %v342
        %v440 = vpop.f32.mrb[0].mxu0
        %v441 = vadd.f32 0.0, %v440
        %v442 = vpop.f32.mrb[0].mxu0
        %443 = vmatprep.mubr.f32.mxu0 0.0
        %444 = vmatmul.mubr.f32.gmra.mrb[0].mxu0 %v343
        %v445 = vpop.f32.mrb[0].mxu0
        %v446 = vadd.f32 0.0, %v445
        %v447 = vpop.f32.mrb[0].mxu0
        %448 = vmatprep.mubr.f32.mxu0 0.0
        %449 = vmatmul.mubr.f32.gmra.mrb[0].mxu0 %v344
        %v450 = vpop.f32.mrb[0].mxu0
        %v451 = vadd.f32 0.0, %v450
        %v452 = vpop.f32.mrb[0].mxu0
        %453 = vmatprep.mubr.f32.mxu0 0.0
        %454 = vmatmul.mubr.f32.gmra.mrb[0].mxu0 %v345
        %v455 = vpop.f32.mrb[0].mxu0
        %v456 = vadd.f32 0.0, %v455
        %v457 = vpop.f32.mrb[0].mxu0
        %458 = vmatprep.mubr.f32.mxu0 0.0
        %459 = vmatmul.mubr.f32.gmra.mrb[0].mxu0 %v346
        %v460 = vpop.f32.mrb[0].mxu0
        %v461 = vadd.f32 0.0, %v460
        %v462 = vpop.f32.mrb[0].mxu0
        %463 = vmatprep.mubr.f32.mxu0 0.0
        %464 = vmatmul.mubr.f32.gmra.mrb[0].mxu0 %v347
        %v465 = vpop.f32.mrb[0].mxu0
        %v466 = vadd.f32 0.0, %v465
        %v467 = vpop.f32.mrb[0].mxu0
        %468 = vmatprep.mubr.f32.mxu0 0.0
        %469 = vmatmul.mubr.f32.gmra.mrb[0].mxu0 %v348
        %v470 = vpop.f32.mrb[0].mxu0
        %v471 = vadd.f32 0.0, %v470
        %v472 = vpop.f32.mrb[0].mxu0
        %473 = vmatprep.mubr.f32.mxu0 0.0
        %474 = vmatmul.mubr.f32.gmra.mrb[0].mxu0 %v349
        %v475 = vpop.f32.mrb[0].mxu0
        %v476 = vadd.f32 0.0, %v475
        %v477 = vpop.f32.mrb[0].mxu0
        %478 = vmatprep.mubr.f32.mxu0 0.0
        %479 = vmatmul.mubr.f32.gmra.mrb[0].mxu0 %v350
        %v480 = vpop.f32.mrb[0].mxu0
        %v481 = vadd.f32 0.0, %v480
        %v482 = vpop.f32.mrb[0].mxu0
        %483 = vmatprep.mubr.f32.mxu0 0.0
        %484 = vmatmul.mubr.f32.gmra.mrb[0].mxu0 %v351
        %v485 = vpop.f32.mrb[0].mxu0
        %v486 = vadd.f32 0.0, %v485
        %v487 = vpop.f32.mrb[0].mxu0
        %488 = vmatprep.mubr.f32.mxu0 0.0
        %489 = vmatmul.mubr.f32.gmra.mrb[0].mxu0 %v352
        %v490 = vpop.f32.mrb[0].mxu0
        %v491 = vadd.f32 0.0, %v490
        %v492 = vpop.f32.mrb[0].mxu0
        %493 = vmatprep.mubr.f32.mxu0 0.0
        %494 = vmatmul.mubr.f32.gmra.mrb[0].mxu0 %v353
        %v495 = vpop.f32.mrb[0].mxu0
        %v496 = vadd.f32 0.0, %v495
        %v497 = vpop.f32.mrb[0].mxu0
        %498 = vmatprep.mubr.f32.mxu0 0.0
        %499 = vmatmul.mubr.f32.gmra.mrb[0].mxu0 %v354
        %v500 = vpop.f32.mrb[0].mxu0
        %v501 = vadd.f32 0.0, %v500
        %v502 = vpop.f32.mrb[0].mxu0
        %503 = vmatprep.mubr.f32.mxu0 0.0
        %504 = vmatmul.mubr.f32.gmra.mrb[0].mxu0 %v355
        %v505 = vpop.f32.mrb[0].mxu0
        %v506 = vadd.f32 0.0, %v505
        %v507 = vpop.f32.mrb[0].mxu0
        %508 = vmatprep.mubr.f32.mxu0 0.0
        %509 = vmatmul.mubr.f32.gmra.mrb[0].mxu0 %v356
        %v510 = vpop.f32.mrb[0].mxu0
        %v511 = vadd.f32 0.0, %v510
        %v512 = vpop.f32.mrb[0].mxu0
        %513 = vmatprep.mubr.f32.mxu0 0.0
        %514 = vmatmul.mubr.f32.gmra.mrb[0].mxu0 %v357
        %v515 = vpop.f32.mrb[0].mxu0
        %v516 = vadd.f32 0.0, %v515
        %v517 = vpop.f32.mrb[0].mxu0
        %518 = vdwg.mxu0
        %v519 = vld [vmem:[%s280] sm:$0xff]
        %v520 = vld [vmem:[%s280 + $0x8] sm:$0xff]
        %v521 = vld [vmem:[%s280 + $0x10] sm:$0xff]
        %v522 = vld [vmem:[%s280 + $0x18] sm:$0xff]
        %v523 = vld [vmem:[%s280 + $0x20] sm:$0xff]
        %v524 = vld [vmem:[%s280 + $0x28] sm:$0xff]
        %v525 = vld [vmem:[%s280 + $0x30] sm:$0xff]
        %v526 = vld [vmem:[%s280 + $0x38] sm:$0xff]
        %v527 = vld [vmem:[%s280 + $0x40] sm:$0xff]
        %v528 = vld [vmem:[%s280 + $0x48] sm:$0xff]
        %v529 = vld [vmem:[%s280 + $0x50] sm:$0xff]
        %v530 = vld [vmem:[%s280 + $0x58] sm:$0xff]
        %v531 = vld [vmem:[%s280 + $0x60] sm:$0xff]
        %v532 = vld [vmem:[%s280 + $0x68] sm:$0xff]
        %v533 = vld [vmem:[%s280 + $0x70] sm:$0xff]
        %v534 = vld [vmem:[%s280 + $0x78] sm:$0xff]
        %535 = vmatprep.subr.mxu0 0.0
        %536 = vmatpush1.msra.mxu0 %v519
        %537 = vmatprep.subr.mxu0 0.0
        %538 = vmatpush1.msra.mxu0 %v520
        %539 = vmatprep.subr.mxu0 0.0
        %540 = vmatpush1.msra.mxu0 %v521
        %541 = vmatprep.subr.mxu0 0.0
        %542 = vmatpush1.msra.mxu0 %v522
        %543 = vmatprep.subr.mxu0 0.0
        %544 = vmatpush1.msra.mxu0 %v523
        %545 = vmatprep.subr.mxu0 0.0
        %546 = vmatpush1.msra.mxu0 %v524
        %547 = vmatprep.subr.mxu0 0.0
        %548 = vmatpush1.msra.mxu0 %v525
        %549 = vmatprep.subr.mxu0 0.0
        %550 = vmatpush1.msra.mxu0 %v526
        %551 = vmatprep.subr.mxu0 0.0
        %552 = vmatpush1.msra.mxu0 %v527
        %553 = vmatprep.subr.mxu0 0.0
        %554 = vmatpush1.msra.mxu0 %v528
        %555 = vmatprep.subr.mxu0 0.0
        %556 = vmatpush1.msra.mxu0 %v529
        %557 = vmatprep.subr.mxu0 0.0
        %558 = vmatpush1.msra.mxu0 %v530
        %559 = vmatprep.subr.mxu0 0.0
        %560 = vmatpush1.msra.mxu0 %v531
        %561 = vmatprep.subr.mxu0 0.0
        %562 = vmatpush1.msra.mxu0 %v532
        %563 = vmatprep.subr.mxu0 0.0
        %564 = vmatpush1.msra.mxu0 %v533
        %565 = vmatprep.subr.mxu0 0.0
        %566 = vmatpush1.msra.mxu0 %v534
        %567 = vmatprep.subr.mxu0 0.0
        %568 = vmatpush1.msra.mxu0 0.0
        %569 = vmatprep.subr.mxu0 0.0
        %570 = vmatpush1.msra.mxu0 0.0
        %571 = vmatprep.subr.mxu0 0.0
        %572 = vmatpush1.msra.mxu0 0.0
        %573 = vmatprep.subr.mxu0 0.0
        %574 = vmatpush1.msra.mxu0 0.0
        %575 = vmatprep.subr.mxu0 0.0
        %576 = vmatpush1.msra.mxu0 0.0
        %577 = vmatprep.subr.mxu0 0.0
        %578 = vmatpush1.msra.mxu0 0.0
        %579 = vmatprep.subr.mxu0 0.0
        %580 = vmatpush1.msra.mxu0 0.0
        %581 = vmatprep.subr.mxu0 0.0
        %582 = vmatpush1.msra.mxu0 0.0
        %583 = vmatprep.subr.mxu0 0.0
        %584 = vmatpush1.msra.mxu0 0.0
        %585 = vmatprep.subr.mxu0 0.0
        %586 = vmatpush1.msra.mxu0 0.0
        %587 = vmatprep.subr.mxu0 0.0
        %588 = vmatpush1.msra.mxu0 0.0
        %589 = vmatprep.subr.mxu0 0.0
        %590 = vmatpush1.msra.mxu0 0.0
        %591 = vmatprep.subr.mxu0 0.0
        %592 = vmatpush1.msra.mxu0 0.0
        %593 = vmatprep.subr.mxu0 0.0
        %594 = vmatpush1.msra.mxu0 0.0
        %595 = vmatprep.subr.mxu0 0.0
        %596 = vmatpush1.msra.mxu0 0.0
        %597 = vmatprep.subr.mxu0 0.0
        %598 = vmatpush1.msra.mxu0 0.0
        %599 = vmatprep.mubr.f32.mxu0 0.0
        %600 = vmatmul.mubr.f32.gmra.mrb[0].mxu0 %v342
        %v601 = vpop.f32.mrb[0].mxu0
        %v602 = vadd.f32 0.0, %v601
        %v603 = vpop.f32.mrb[0].mxu0
        %604 = vmatprep.mubr.f32.mxu0 0.0
        %605 = vmatmul.mubr.f32.gmra.mrb[0].mxu0 %v343
        %v606 = vpop.f32.mrb[0].mxu0
        %v607 = vadd.f32 0.0, %v606
        %v608 = vpop.f32.mrb[0].mxu0
        %609 = vmatprep.mubr.f32.mxu0 0.0
        %610 = vmatmul.mubr.f32.gmra.mrb[0].mxu0 %v344
        %v611 = vpop.f32.mrb[0].mxu0
        %v612 = vadd.f32 0.0, %v611
        %v613 = vpop.f32.mrb[0].mxu0
        %614 = vmatprep.mubr.f32.mxu0 0.0
        %615 = vmatmul.mubr.f32.gmra.mrb[0].mxu0 %v345
        %v616 = vpop.f32.mrb[0].mxu0
        %v617 = vadd.f32 0.0, %v616
        %v618 = vpop.f32.mrb[0].mxu0
        %619 = vmatprep.mubr.f32.mxu0 0.0
        %620 = vmatmul.mubr.f32.gmra.mrb[0].mxu0 %v346
        %v621 = vpop.f32.mrb[0].mxu0
        %v622 = vadd.f32 0.0, %v621
        %v623 = vpop.f32.mrb[0].mxu0
        %624 = vmatprep.mubr.f32.mxu0 0.0
        %625 = vmatmul.mubr.f32.gmra.mrb[0].mxu0 %v347
        %v626 = vpop.f32.mrb[0].mxu0
        %v627 = vadd.f32 0.0, %v626
        %v628 = vpop.f32.mrb[0].mxu0
        %629 = vmatprep.mubr.f32.mxu0 0.0
        %630 = vmatmul.mubr.f32.gmra.mrb[0].mxu0 %v348
        %v631 = vpop.f32.mrb[0].mxu0
        %v632 = vadd.f32 0.0, %v631
        %v633 = vpop.f32.mrb[0].mxu0
        %634 = vmatprep.mubr.f32.mxu0 0.0
        %635 = vmatmul.mubr.f32.gmra.mrb[0].mxu0 %v349
        %v636 = vpop.f32.mrb[0].mxu0
        %v637 = vadd.f32 0.0, %v636
        %v638 = vpop.f32.mrb[0].mxu0
        %639 = vmatprep.mubr.f32.mxu0 0.0
        %640 = vmatmul.mubr.f32.gmra.mrb[0].mxu0 %v350
        %v641 = vpop.f32.mrb[0].mxu0
        %v642 = vadd.f32 0.0, %v641
        %v643 = vpop.f32.mrb[0].mxu0
        %644 = vmatprep.mubr.f32.mxu0 0.0
        %645 = vmatmul.mubr.f32.gmra.mrb[0].mxu0 %v351
        %v646 = vpop.f32.mrb[0].mxu0
        %v647 = vadd.f32 0.0, %v646
        %v648 = vpop.f32.mrb[0].mxu0
        %649 = vmatprep.mubr.f32.mxu0 0.0
        %650 = vmatmul.mubr.f32.gmra.mrb[0].mxu0 %v352
        %v651 = vpop.f32.mrb[0].mxu0
        %v652 = vadd.f32 0.0, %v651
        %v653 = vpop.f32.mrb[0].mxu0
        %654 = vmatprep.mubr.f32.mxu0 0.0
        %655 = vmatmul.mubr.f32.gmra.mrb[0].mxu0 %v353
        %v656 = vpop.f32.mrb[0].mxu0
        %v657 = vadd.f32 0.0, %v656
        %v658 = vpop.f32.mrb[0].mxu0
        %659 = vmatprep.mubr.f32.mxu0 0.0
        %660 = vmatmul.mubr.f32.gmra.mrb[0].mxu0 %v354
        %v661 = vpop.f32.mrb[0].mxu0
        %v662 = vadd.f32 0.0, %v661
        %v663 = vpop.f32.mrb[0].mxu0
        %664 = vmatprep.mubr.f32.mxu0 0.0
        %665 = vmatmul.mubr.f32.gmra.mrb[0].mxu0 %v355
        %v666 = vpop.f32.mrb[0].mxu0
        %v667 = vadd.f32 0.0, %v666
        %v668 = vpop.f32.mrb[0].mxu0
        %669 = vmatprep.mubr.f32.mxu0 0.0
        %670 = vmatmul.mubr.f32.gmra.mrb[0].mxu0 %v356
        %v671 = vpop.f32.mrb[0].mxu0
        %v672 = vadd.f32 0.0, %v671
        %v673 = vpop.f32.mrb[0].mxu0
        %674 = vmatprep.mubr.f32.mxu0 0.0
        %675 = vmatmul.mubr.f32.gmra.mrb[0].mxu0 %v357
        %v676 = vpop.f32.mrb[0].mxu0
        %v677 = vadd.f32 0.0, %v676
        %v678 = vpop.f32.mrb[0].mxu0
        %679 = vdwg.mxu0
        %v680 = vxor.u32 %v441, 2147483648
        %v681 = vxor.u32 %v446, 2147483648
        %v682 = vxor.u32 %v451, 2147483648
        %v683 = vxor.u32 %v456, 2147483648
        %v684 = vxor.u32 %v461, 2147483648
        %v685 = vxor.u32 %v466, 2147483648
        %v686 = vxor.u32 %v471, 2147483648
        %v687 = vxor.u32 %v476, 2147483648
        %v688 = vxor.u32 %v481, 2147483648
        %v689 = vxor.u32 %v486, 2147483648
        %v690 = vxor.u32 %v491, 2147483648
        %v691 = vxor.u32 %v496, 2147483648
        %v692 = vxor.u32 %v501, 2147483648
        %v693 = vxor.u32 %v506, 2147483648
        %v694 = vxor.u32 %v511, 2147483648
        %v695 = vxor.u32 %v516, 2147483648
        %v696 = vmul.f32 %v680, 1.442695
        %v697 = vpow.pop %v696
        %v698 = vmul.f32 %v681, 1.442695
        %v699 = vpow.pop %v698
        %v700 = vmul.f32 %v682, 1.442695
        %v701 = vpow.pop %v700
        %v702 = vmul.f32 %v683, 1.442695
        %v703 = vpow.pop %v702
        %v704 = vmul.f32 %v684, 1.442695
        %v705 = vpow.pop %v704
        %v706 = vmul.f32 %v685, 1.442695
        %v707 = vpow.pop %v706
        %v708 = vmul.f32 %v686, 1.442695
        %v709 = vpow.pop %v708
        %v710 = vmul.f32 %v687, 1.442695
        %v711 = vpow.pop %v710
        %v712 = vmul.f32 %v688, 1.442695
        %v713 = vpow.pop %v712
        %v714 = vmul.f32 %v689, 1.442695
        %v715 = vpow.pop %v714
        %v716 = vmul.f32 %v690, 1.442695
        %v717 = vpow.pop %v716
        %v718 = vmul.f32 %v691, 1.442695
        %v719 = vpow.pop %v718
        %v720 = vmul.f32 %v692, 1.442695
        %v721 = vpow.pop %v720
        %v722 = vmul.f32 %v693, 1.442695
        %v723 = vpow.pop %v722
        %v724 = vmul.f32 %v694, 1.442695
        %v725 = vpow.pop %v724
        %v726 = vmul.f32 %v695, 1.442695
        %v727 = vpow.pop %v726
        %v728 = vadd.f32 %v697, 1.0
        %v729 = vadd.f32 %v699, 1.0
        %v730 = vadd.f32 %v701, 1.0
        %v731 = vadd.f32 %v703, 1.0
        %v732 = vadd.f32 %v705, 1.0
        %v733 = vadd.f32 %v707, 1.0
        %v734 = vadd.f32 %v709, 1.0
        %v735 = vadd.f32 %v711, 1.0
        %v736 = vadd.f32 %v713, 1.0
        %v737 = vadd.f32 %v715, 1.0
        %v738 = vadd.f32 %v717, 1.0
        %v739 = vadd.f32 %v719, 1.0
        %v740 = vadd.f32 %v721, 1.0
        %v741 = vadd.f32 %v723, 1.0
        %v742 = vadd.f32 %v725, 1.0
        %v743 = vadd.f32 %v727, 1.0
        %v744 = vrcp.pop %v728
        %v745 = vmul.f32 1.0, %v744
        %v746 = vrcp.pop %v729
        %v747 = vmul.f32 1.0, %v746
        %v748 = vrcp.pop %v730
        %v749 = vmul.f32 1.0, %v748
        %v750 = vrcp.pop %v731
        %v751 = vmul.f32 1.0, %v750
        %v752 = vrcp.pop %v732
        %v753 = vmul.f32 1.0, %v752
        %v754 = vrcp.pop %v733
        %v755 = vmul.f32 1.0, %v754
        %v756 = vrcp.pop %v734
        %v757 = vmul.f32 1.0, %v756
        %v758 = vrcp.pop %v735
        %v759 = vmul.f32 1.0, %v758
        %v760 = vrcp.pop %v736
        %v761 = vmul.f32 1.0, %v760
        %v762 = vrcp.pop %v737
        %v763 = vmul.f32 1.0, %v762
        %v764 = vrcp.pop %v738
        %v765 = vmul.f32 1.0, %v764
        %v766 = vrcp.pop %v739
        %v767 = vmul.f32 1.0, %v766
        %v768 = vrcp.pop %v740
        %v769 = vmul.f32 1.0, %v768
        %v770 = vrcp.pop %v741
        %v771 = vmul.f32 1.0, %v770
        %v772 = vrcp.pop %v742
        %v773 = vmul.f32 1.0, %v772
        %v774 = vrcp.pop %v743
        %v775 = vmul.f32 1.0, %v774
        %v776 = vmul.f32 %v441, %v745
        %v777 = vmul.f32 %v446, %v747
        %v778 = vmul.f32 %v451, %v749
        %v779 = vmul.f32 %v456, %v751
        %v780 = vmul.f32 %v461, %v753
        %v781 = vmul.f32 %v466, %v755
        %v782 = vmul.f32 %v471, %v757
        %v783 = vmul.f32 %v476, %v759
        %v784 = vmul.f32 %v481, %v761
        %v785 = vmul.f32 %v486, %v763
        %v786 = vmul.f32 %v491, %v765
        %v787 = vmul.f32 %v496, %v767
        %v788 = vmul.f32 %v501, %v769
        %v789 = vmul.f32 %v506, %v771
        %v790 = vmul.f32 %v511, %v773
        %v791 = vmul.f32 %v516, %v775
        %v792 = vmul.f32 %v776, %v602
        %v793 = vmul.f32 %v777, %v607
        %v794 = vmul.f32 %v778, %v612
        %v795 = vmul.f32 %v779, %v617
        %v796 = vmul.f32 %v780, %v622
        %v797 = vmul.f32 %v781, %v627
        %v798 = vmul.f32 %v782, %v632
        %v799 = vmul.f32 %v783, %v637
        %v800 = vmul.f32 %v784, %v642
        %v801 = vmul.f32 %v785, %v647
        %v802 = vmul.f32 %v786, %v652
        %v803 = vmul.f32 %v787, %v657
        %v804 = vmul.f32 %v788, %v662
        %v805 = vmul.f32 %v789, %v667
        %v806 = vmul.f32 %v790, %v672
        %v807 = vmul.f32 %v791, %v677
        %808 = vst [vmem:[#allocation3] sm:$0xff] %v792
        %809 = vst [vmem:[#allocation3 + $0x8] sm:$0xff] %v793
        %810 = vst [vmem:[#allocation3 + $0x10] sm:$0xff] %v794
        %811 = vst [vmem:[#allocation3 + $0x18] sm:$0xff] %v795
        %812 = vst [vmem:[#allocation3 + $0x20] sm:$0xff] %v796
        %813 = vst [vmem:[#allocation3 + $0x28] sm:$0xff] %v797
        %814 = vst [vmem:[#allocation3 + $0x30] sm:$0xff] %v798
        %815 = vst [vmem:[#allocation3 + $0x38] sm:$0xff] %v799
        %816 = vst [vmem:[#allocation3 + $0x40] sm:$0xff] %v800
        %817 = vst [vmem:[#allocation3 + $0x48] sm:$0xff] %v801
        %818 = vst [vmem:[#allocation3 + $0x50] sm:$0xff] %v802
        %819 = vst [vmem:[#allocation3 + $0x58] sm:$0xff] %v803
        %820 = vst [vmem:[#allocation3 + $0x60] sm:$0xff] %v804
        %821 = vst [vmem:[#allocation3 + $0x68] sm:$0xff] %v805
        %822 = vst [vmem:[#allocation3 + $0x70] sm:$0xff] %v806
        %823 = vst [vmem:[#allocation3 + $0x78] sm:$0xff] %v807
        %v824 = vld [vmem:[#allocation2] sm:$0xff]
        %v825 = vld [vmem:[#allocation2 + $0x8] sm:$0xff]
        %v826 = vld [vmem:[#allocation2 + $0x10] sm:$0xff]
        %v827 = vld [vmem:[#allocation2 + $0x18] sm:$0xff]
        %v828 = vld [vmem:[#allocation2 + $0x20] sm:$0xff]
        %v829 = vld [vmem:[#allocation2 + $0x28] sm:$0xff]
        %v830 = vld [vmem:[#allocation2 + $0x30] sm:$0xff]
        %v831 = vld [vmem:[#allocation2 + $0x38] sm:$0xff]
        %v832 = vld [vmem:[#allocation2 + $0x40] sm:$0xff]
        %v833 = vld [vmem:[#allocation2 + $0x48] sm:$0xff]
        %v834 = vld [vmem:[#allocation2 + $0x50] sm:$0xff]
        %v835 = vld [vmem:[#allocation2 + $0x58] sm:$0xff]
        %v836 = vld [vmem:[#allocation2 + $0x60] sm:$0xff]
        %v837 = vld [vmem:[#allocation2 + $0x68] sm:$0xff]
        %v838 = vld [vmem:[#allocation2 + $0x70] sm:$0xff]
        %v839 = vld [vmem:[#allocation2 + $0x78] sm:$0xff]
        %v840 = vld [vmem:[#allocation3] sm:$0xff]
        %v841 = vld [vmem:[#allocation3 + $0x8] sm:$0xff]
        %v842 = vld [vmem:[#allocation3 + $0x10] sm:$0xff]
        %v843 = vld [vmem:[#allocation3 + $0x18] sm:$0xff]
        %v844 = vld [vmem:[#allocation3 + $0x20] sm:$0xff]
        %v845 = vld [vmem:[#allocation3 + $0x28] sm:$0xff]
        %v846 = vld [vmem:[#allocation3 + $0x30] sm:$0xff]
        %v847 = vld [vmem:[#allocation3 + $0x38] sm:$0xff]
        %v848 = vld [vmem:[#allocation3 + $0x40] sm:$0xff]
        %v849 = vld [vmem:[#allocation3 + $0x48] sm:$0xff]
        %v850 = vld [vmem:[#allocation3 + $0x50] sm:$0xff]
        %v851 = vld [vmem:[#allocation3 + $0x58] sm:$0xff]
        %v852 = vld [vmem:[#allocation3 + $0x60] sm:$0xff]
        %v853 = vld [vmem:[#allocation3 + $0x68] sm:$0xff]
        %v854 = vld [vmem:[#allocation3 + $0x70] sm:$0xff]
        %v855 = vld [vmem:[#allocation3 + $0x78] sm:$0xff]
        %v856 = vld [vmem:[%s289] sm:$0xff]
        %v857 = vld [vmem:[%s289 + $0x8] sm:$0xff]
        %v858 = vld [vmem:[%s289 + $0x10] sm:$0xff]
        %v859 = vld [vmem:[%s289 + $0x18] sm:$0xff]
        %v860 = vld [vmem:[%s289 + $0x20] sm:$0xff]
        %v861 = vld [vmem:[%s289 + $0x28] sm:$0xff]
        %v862 = vld [vmem:[%s289 + $0x30] sm:$0xff]
        %v863 = vld [vmem:[%s289 + $0x38] sm:$0xff]
        %v864 = vld [vmem:[%s289 + $0x40] sm:$0xff]
        %v865 = vld [vmem:[%s289 + $0x48] sm:$0xff]
        %v866 = vld [vmem:[%s289 + $0x50] sm:$0xff]
        %v867 = vld [vmem:[%s289 + $0x58] sm:$0xff]
        %v868 = vld [vmem:[%s289 + $0x60] sm:$0xff]
        %v869 = vld [vmem:[%s289 + $0x68] sm:$0xff]
        %v870 = vld [vmem:[%s289 + $0x70] sm:$0xff]
        %v871 = vld [vmem:[%s289 + $0x78] sm:$0xff]
        %872 = vmatprep.subr.mxu0 0.0
        %873 = vmatpush1.msra.mxu0 %v856
        %874 = vmatprep.subr.mxu0 0.0
        %875 = vmatpush1.msra.mxu0 %v857
        %876 = vmatprep.subr.mxu0 0.0
        %877 = vmatpush1.msra.mxu0 %v858
        %878 = vmatprep.subr.mxu0 0.0
        %879 = vmatpush1.msra.mxu0 %v859
        %880 = vmatprep.subr.mxu0 0.0
        %881 = vmatpush1.msra.mxu0 %v860
        %882 = vmatprep.subr.mxu0 0.0
        %883 = vmatpush1.msra.mxu0 %v861
        %884 = vmatprep.subr.mxu0 0.0
        %885 = vmatpush1.msra.mxu0 %v862
        %886 = vmatprep.subr.mxu0 0.0
        %887 = vmatpush1.msra.mxu0 %v863
        %888 = vmatprep.subr.mxu0 0.0
        %889 = vmatpush1.msra.mxu0 %v864
        %890 = vmatprep.subr.mxu0 0.0
        %891 = vmatpush1.msra.mxu0 %v865
        %892 = vmatprep.subr.mxu0 0.0
        %893 = vmatpush1.msra.mxu0 %v866
        %894 = vmatprep.subr.mxu0 0.0
        %895 = vmatpush1.msra.mxu0 %v867
        %896 = vmatprep.subr.mxu0 0.0
        %897 = vmatpush1.msra.mxu0 %v868
        %898 = vmatprep.subr.mxu0 0.0
        %899 = vmatpush1.msra.mxu0 %v869
        %900 = vmatprep.subr.mxu0 0.0
        %901 = vmatpush1.msra.mxu0 %v870
        %902 = vmatprep.subr.mxu0 0.0
        %903 = vmatpush1.msra.mxu0 %v871
        %904 = vmatprep.subr.mxu0 0.0
        %905 = vmatpush1.msra.mxu0 0.0
        %906 = vmatprep.subr.mxu0 0.0
        %907 = vmatpush1.msra.mxu0 0.0
        %908 = vmatprep.subr.mxu0 0.0
        %909 = vmatpush1.msra.mxu0 0.0
        %910 = vmatprep.subr.mxu0 0.0
        %911 = vmatpush1.msra.mxu0 0.0
        %912 = vmatprep.subr.mxu0 0.0
        %913 = vmatpush1.msra.mxu0 0.0
        %914 = vmatprep.subr.mxu0 0.0
        %915 = vmatpush1.msra.mxu0 0.0
        %916 = vmatprep.subr.mxu0 0.0
        %917 = vmatpush1.msra.mxu0 0.0
        %918 = vmatprep.subr.mxu0 0.0
        %919 = vmatpush1.msra.mxu0 0.0
        %920 = vmatprep.subr.mxu0 0.0
        %921 = vmatpush1.msra.mxu0 0.0
        %922 = vmatprep.subr.mxu0 0.0
        %923 = vmatpush1.msra.mxu0 0.0
        %924 = vmatprep.subr.mxu0 0.0
        %925 = vmatpush1.msra.mxu0 0.0
        %926 = vmatprep.subr.mxu0 0.0
        %927 = vmatpush1.msra.mxu0 0.0
        %928 = vmatprep.subr.mxu0 0.0
        %929 = vmatpush1.msra.mxu0 0.0
        %930 = vmatprep.subr.mxu0 0.0
        %931 = vmatpush1.msra.mxu0 0.0
        %932 = vmatprep.subr.mxu0 0.0
        %933 = vmatpush1.msra.mxu0 0.0
        %934 = vmatprep.subr.mxu0 0.0
        %935 = vmatpush1.msra.mxu0 0.0
        %936 = vmatprep.mubr.f32.mxu0 0.0
        %937 = vmatmul.mubr.f32.gmra.mrb[0].mxu0 %v840
        %v938 = vpop.f32.mrb[0].mxu0
        %v939 = vadd.f32 0.0, %v938
        %v940 = vpop.f32.mrb[0].mxu0
        %941 = vmatprep.mubr.f32.mxu0 0.0
        %942 = vmatmul.mubr.f32.gmra.mrb[0].mxu0 %v841
        %v943 = vpop.f32.mrb[0].mxu0
        %v944 = vadd.f32 0.0, %v943
        %v945 = vpop.f32.mrb[0].mxu0
        %946 = vmatprep.mubr.f32.mxu0 0.0
        %947 = vmatmul.mubr.f32.gmra.mrb[0].mxu0 %v842
        %v948 = vpop.f32.mrb[0].mxu0
        %v949 = vadd.f32 0.0, %v948
        %v950 = vpop.f32.mrb[0].mxu0
        %951 = vmatprep.mubr.f32.mxu0 0.0
        %952 = vmatmul.mubr.f32.gmra.mrb[0].mxu0 %v843
        %v953 = vpop.f32.mrb[0].mxu0
        %v954 = vadd.f32 0.0, %v953
        %v955 = vpop.f32.mrb[0].mxu0
        %956 = vmatprep.mubr.f32.mxu0 0.0
        %957 = vmatmul.mubr.f32.gmra.mrb[0].mxu0 %v844
        %v958 = vpop.f32.mrb[0].mxu0
        %v959 = vadd.f32 0.0, %v958
        %v960 = vpop.f32.mrb[0].mxu0
        %961 = vmatprep.mubr.f32.mxu0 0.0
        %962 = vmatmul.mubr.f32.gmra.mrb[0].mxu0 %v845
        %v963 = vpop.f32.mrb[0].mxu0
        %v964 = vadd.f32 0.0, %v963
        %v965 = vpop.f32.mrb[0].mxu0
        %966 = vmatprep.mubr.f32.mxu0 0.0
        %967 = vmatmul.mubr.f32.gmra.mrb[0].mxu0 %v846
        %v968 = vpop.f32.mrb[0].mxu0
        %v969 = vadd.f32 0.0, %v968
        %v970 = vpop.f32.mrb[0].mxu0
        %971 = vmatprep.mubr.f32.mxu0 0.0
        %972 = vmatmul.mubr.f32.gmra.mrb[0].mxu0 %v847
        %v973 = vpop.f32.mrb[0].mxu0
        %v974 = vadd.f32 0.0, %v973
        %v975 = vpop.f32.mrb[0].mxu0
        %976 = vmatprep.mubr.f32.mxu0 0.0
        %977 = vmatmul.mubr.f32.gmra.mrb[0].mxu0 %v848
        %v978 = vpop.f32.mrb[0].mxu0
        %v979 = vadd.f32 0.0, %v978
        %v980 = vpop.f32.mrb[0].mxu0
        %981 = vmatprep.mubr.f32.mxu0 0.0
        %982 = vmatmul.mubr.f32.gmra.mrb[0].mxu0 %v849
        %v983 = vpop.f32.mrb[0].mxu0
        %v984 = vadd.f32 0.0, %v983
        %v985 = vpop.f32.mrb[0].mxu0
        %986 = vmatprep.mubr.f32.mxu0 0.0
        %987 = vmatmul.mubr.f32.gmra.mrb[0].mxu0 %v850
        %v988 = vpop.f32.mrb[0].mxu0
        %v989 = vadd.f32 0.0, %v988
        %v990 = vpop.f32.mrb[0].mxu0
        %991 = vmatprep.mubr.f32.mxu0 0.0
        %992 = vmatmul.mubr.f32.gmra.mrb[0].mxu0 %v851
        %v993 = vpop.f32.mrb[0].mxu0
        %v994 = vadd.f32 0.0, %v993
        %v995 = vpop.f32.mrb[0].mxu0
        %996 = vmatprep.mubr.f32.mxu0 0.0
        %997 = vmatmul.mubr.f32.gmra.mrb[0].mxu0 %v852
        %v998 = vpop.f32.mrb[0].mxu0
        %v999 = vadd.f32 0.0, %v998
        %v1000 = vpop.f32.mrb[0].mxu0
        %1001 = vmatprep.mubr.f32.mxu0 0.0
        %1002 = vmatmul.mubr.f32.gmra.mrb[0].mxu0 %v853
        %v1003 = vpop.f32.mrb[0].mxu0
        %v1004 = vadd.f32 0.0, %v1003
        %v1005 = vpop.f32.mrb[0].mxu0
        %1006 = vmatprep.mubr.f32.mxu0 0.0
        %1007 = vmatmul.mubr.f32.gmra.mrb[0].mxu0 %v854
        %v1008 = vpop.f32.mrb[0].mxu0
        %v1009 = vadd.f32 0.0, %v1008
        %v1010 = vpop.f32.mrb[0].mxu0
        %1011 = vmatprep.mubr.f32.mxu0 0.0
        %1012 = vmatmul.mubr.f32.gmra.mrb[0].mxu0 %v855
        %v1013 = vpop.f32.mrb[0].mxu0
        %v1014 = vadd.f32 0.0, %v1013
        %v1015 = vpop.f32.mrb[0].mxu0
        %1016 = vdwg.mxu0
        %v1017 = vadd.f32 %v824, %v939
        %v1018 = vadd.f32 %v825, %v944
        %v1019 = vadd.f32 %v826, %v949
        %v1020 = vadd.f32 %v827, %v954
        %v1021 = vadd.f32 %v828, %v959
        %v1022 = vadd.f32 %v829, %v964
        %v1023 = vadd.f32 %v830, %v969
        %v1024 = vadd.f32 %v831, %v974
        %v1025 = vadd.f32 %v832, %v979
        %v1026 = vadd.f32 %v833, %v984
        %v1027 = vadd.f32 %v834, %v989
        %v1028 = vadd.f32 %v835, %v994
        %v1029 = vadd.f32 %v836, %v999
        %v1030 = vadd.f32 %v837, %v1004
        %v1031 = vadd.f32 %v838, %v1009
        %v1032 = vadd.f32 %v839, %v1014
        %1033 = vst [vmem:[#allocation2] sm:$0xff] %v1017
        %1034 = vst [vmem:[#allocation2 + $0x8] sm:$0xff] %v1018
        %1035 = vst [vmem:[#allocation2 + $0x10] sm:$0xff] %v1019
        %1036 = vst [vmem:[#allocation2 + $0x18] sm:$0xff] %v1020
        %1037 = vst [vmem:[#allocation2 + $0x20] sm:$0xff] %v1021
        %1038 = vst [vmem:[#allocation2 + $0x28] sm:$0xff] %v1022
        %1039 = vst [vmem:[#allocation2 + $0x30] sm:$0xff] %v1023
        %1040 = vst [vmem:[#allocation2 + $0x38] sm:$0xff] %v1024
        %1041 = vst [vmem:[#allocation2 + $0x40] sm:$0xff] %v1025
        %1042 = vst [vmem:[#allocation2 + $0x48] sm:$0xff] %v1026
        %1043 = vst [vmem:[#allocation2 + $0x50] sm:$0xff] %v1027
        %1044 = vst [vmem:[#allocation2 + $0x58] sm:$0xff] %v1028
        %1045 = vst [vmem:[#allocation2 + $0x60] sm:$0xff] %v1029
        %1046 = vst [vmem:[#allocation2 + $0x68] sm:$0xff] %v1030
        %1047 = vst [vmem:[#allocation2 + $0x70] sm:$0xff] %v1031
        %1048 = vst [vmem:[#allocation2 + $0x78] sm:$0xff] %v1032
        %p1049 = scmp.eq.s32.totalorder %s28, 2
        // Predicated region
        $region57: #{tpu_custom_call.1} parent=35 // pred_check
          %p1050 = pneg %p1049
        $region58: #{tpu_custom_call.1} parent=35 // pred_check_branch
          %1052 = sbr.rel (%p1050) target = $region60
        $region59: #{tpu_custom_call.1} parent=35 // pred_region
          %v1053 = vld [vmem:[#allocation2] sm:$0xff]
          %v1054 = vld [vmem:[#allocation2 + $0x8] sm:$0xff]
          %v1055 = vld [vmem:[#allocation2 + $0x10] sm:$0xff]
          %v1056 = vld [vmem:[#allocation2 + $0x18] sm:$0xff]
          %v1057 = vld [vmem:[#allocation2 + $0x20] sm:$0xff]
          %v1058 = vld [vmem:[#allocation2 + $0x28] sm:$0xff]
          %v1059 = vld [vmem:[#allocation2 + $0x30] sm:$0xff]
          %v1060 = vld [vmem:[#allocation2 + $0x38] sm:$0xff]
          %v1061 = vld [vmem:[#allocation2 + $0x40] sm:$0xff]
          %v1062 = vld [vmem:[#allocation2 + $0x48] sm:$0xff]
          %v1063 = vld [vmem:[#allocation2 + $0x50] sm:$0xff]
          %v1064 = vld [vmem:[#allocation2 + $0x58] sm:$0xff]
          %v1065 = vld [vmem:[#allocation2 + $0x60] sm:$0xff]
          %v1066 = vld [vmem:[#allocation2 + $0x68] sm:$0xff]
          %v1067 = vld [vmem:[#allocation2 + $0x70] sm:$0xff]
          %v1068 = vld [vmem:[#allocation2 + $0x78] sm:$0xff]
          %1069 = vst [vmem:[#allocation12] sm:$0xff] %v1053
          %1070 = vst [vmem:[#allocation12 + $0x8] sm:$0xff] %v1054
          %1071 = vst [vmem:[#allocation12 + $0x10] sm:$0xff] %v1055
          %1072 = vst [vmem:[#allocation12 + $0x18] sm:$0xff] %v1056
          %1073 = vst [vmem:[#allocation12 + $0x20] sm:$0xff] %v1057
          %1074 = vst [vmem:[#allocation12 + $0x28] sm:$0xff] %v1058
          %1075 = vst [vmem:[#allocation12 + $0x30] sm:$0xff] %v1059
          %1076 = vst [vmem:[#allocation12 + $0x38] sm:$0xff] %v1060
          %1077 = vst [vmem:[#allocation12 + $0x40] sm:$0xff] %v1061
          %1078 = vst [vmem:[#allocation12 + $0x48] sm:$0xff] %v1062
          %1079 = vst [vmem:[#allocation12 + $0x50] sm:$0xff] %v1063
          %1080 = vst [vmem:[#allocation12 + $0x58] sm:$0xff] %v1064
          %1081 = vst [vmem:[#allocation12 + $0x60] sm:$0xff] %v1065
          %1082 = vst [vmem:[#allocation12 + $0x68] sm:$0xff] %v1066
          %1083 = vst [vmem:[#allocation12 + $0x70] sm:$0xff] %v1067
          %1084 = vst [vmem:[#allocation12 + $0x78] sm:$0xff] %v1068
        $region60: #{tpu_custom_call.1} parent=35 // pred_fallthru
          _
        // Predicated region
        $region61: #{tpu_custom_call.1} parent=35 // pred_check
          %p1085 = pneg %p157
        $region62: #{tpu_custom_call.1} parent=35 // pred_check_branch
          %1087 = sbr.rel (%p1085) target = $region64
        $region63: #{tpu_custom_call.1} parent=35 // pred_region
          %s1088 = smul.u32 16, %s27
          %s1090 = ssub.s32 2048, 2048
          %1091 = vsyncadd [#allocation6], %s1090
          %s1092 = smul.addr %s1088, 128
          %s1093 = scalar_lea.hbm %s4, %s1092
          %s1094 = sshll.u32 [#allocation12], 4
          %s1095 = int_to_ptr.vmem [resolvable:$true] %s1094
          %1100 = dma.vmem_to_hbm [thread:$0]  %s1095, 2048, %s1093, [#allocation6], 128, 128, 8
        $region64: #{tpu_custom_call.1} parent=35 // pred_fallthru
          _
        // Predicated region
        $region65: #{tpu_custom_call.1} parent=35 // pred_check
          %p1101 = pneg %p157
        $region66: #{tpu_custom_call.1} parent=35 // pred_check_branch
          %1103 = sbr.rel (%p1101) target = $region68
        $region67: #{tpu_custom_call.1} parent=35 // pred_region
          %1104 = dma.done [#allocation6], 2048
        $region68: #{tpu_custom_call.1} parent=35 // pred_fallthru
          _
      $region36: #{tpu_custom_call.1} parent=5 // pred_fallthru
        _
      %p1105 = scmp.le.s32.totalorder 2, %s18
      // Predicated region
      $region69: #{tpu_custom_call.1} parent=5 // pred_check
        %p1106 = pneg %p1105
      $region70: #{tpu_custom_call.1} parent=5 // pred_check_branch
        %1108 = sbr.rel (%p1106) target = $region72
      $region71: #{tpu_custom_call.1} parent=5 // pred_region
        %s1109 = ssub.s32 %s18, 2
      $region72: #{tpu_custom_call.1} parent=5 // pred_fallthru
        _
    $region6: #{tpu_custom_call.1} parent=1 // loop_footer
      %s22 = sadd.s32 1, %s18
    $region7: #{tpu_custom_call.1} parent=1 // loop_footer_branch
      %17 = sbr.rel target = $region3
    $region8: #{tpu_custom_call.1} parent=1 // loop_exit
      _
    %1110 = vsyncpa [#allocation5], 1
    %s1111 = scalar_lea.sflag [#allocation5], 1
    %1112 = vsyncpa %s1111, 1
    %1113 = vsyncpa [#allocation8], 1
    %s1114 = scalar_lea.sflag [#allocation8], 1
    %1115 = vsyncpa %s1114, 1
    %1116 = vsyncpa [#allocation11], 1
    %s1117 = scalar_lea.sflag [#allocation11], 1
    %1118 = vsyncpa %s1117, 1
    %1119 = vsyncpa [#allocation6], 1
    %s1120 = scalar_lea.sflag [#allocation6], 1
    %1121 = vsyncpa %s1120, 1

</llo_original>
